<compile_context>
chip_gen: v7x
topology: tpu7x:2x2x1
jax: 0.10.0
libtpu: 0.0.40
codegen_flags: <defaults>
</compile_context>

<pallas_src>
import math

import jax
import jax.numpy as jnp
import numpy as np
from jax.experimental import pallas as pl
from jax.experimental.pallas import tpu as pltpu

N = 8              # tokens (rows of X)
D = 32             # input_dim / hidden
H = 4              # bert_n_heads
DK = D // H        # d_k == d_v per head
NBLK = D // N      # column blocks of torch's scrambled reshape (must divide evenly)

SLAB_ROWS = D + N  # 32 weight rows + N bias rows (biases replicated to N rows at init)
SLAB_COLS = 8 * D  # 256 = [w_ar | w_glu(2D) | w_qkv(3D) | wfc | sel]  -> 2 full 128-lane tiles


def _encoder_layer_kernel(x_ref, w_ref, out_ref, ctx_ref):
    x = x_ref[...]                                     # (N, D) f32 activations
    xb = x.astype(jnp.bfloat16)

    # --- carve the packed bf16 weight slab (static slices; loaded straight into vregs) ---
    w_ar  = w_ref[0:D, 0:D]                            # (D, D)   alpha already folded in
    w_glu = w_ref[0:D, D:3 * D]                        # (D, 2D)  [w1 | w2]
    w_qkv = w_ref[0:D, 3 * D:6 * D]                    # (D, 3D)  [wq/sqrt(dk) | wk | wv]
    wfc   = w_ref[0:D, 6 * D:7 * D]                    # (D, D)
    sel   = w_ref[0:D, 7 * D:8 * D]                    # (NBLK*N, D) one-hot scramble selectors
    b_ar  = w_ref[D:D + N, 0:D].astype(jnp.float32)    # (N, D)   pre-replicated bias rows
    b_glu = w_ref[D:D + N, D:3 * D].astype(jnp.float32)  # (N, 2D)

    # --- AdaptiveResidualLayer: Linear(x) + alpha*x  (alpha folded into w_ar host-side) ---
    h = jnp.dot(xb, w_ar, preferred_element_type=jnp.float32) + b_ar       # (N, D) f32
    hb = h.astype(jnp.bfloat16)

    # --- SwiGLU: one fused (D, 2D) matmul, split, sigmoid gate (f32 elementwise) ---
    ab = jnp.dot(hb, w_glu, preferred_element_type=jnp.float32) + b_glu    # (N, 2D) f32
    a_lin = ab[:, :D]
    b_lin = ab[:, D:]
    g = a_lin * (1.0 / (1.0 + jnp.exp(-b_lin)))        # (N, D) f32, lives in vregs only
    gb = g.astype(jnp.bfloat16)

    # --- Fused Q|K|V projection (1/sqrt(d_k) folded into the Q columns host-side) ---
    qkv = jnp.dot(gb, w_qkv, preferred_element_type=jnp.float32)           # (N, 3D) f32

    # --- MultiHeadAttention: per-head scaled-dot-product attention (H=4 static loop) ---
    for hh in range(H):
        q_h = qkv[:, hh * DK:(hh + 1) * DK].astype(jnp.bfloat16)           # (N, DK)
        k_h = qkv[:, D + hh * DK:D + (hh + 1) * DK].astype(jnp.bfloat16)
        v_h = qkv[:, 2 * D + hh * DK:2 * D + (hh + 1) * DK].astype(jnp.bfloat16)
        # scores = (Q_h / sqrt(d_k)) @ K_h^T  -- contract last dims, no explicit transpose.
        scores = jax.lax.dot_general(q_h, k_h, (((1,), (1,)), ((), ())),
                                     preferred_element_type=jnp.float32)   # (N, N) f32
        m = jnp.max(scores, axis=-1, keepdims=True)
        e = jnp.exp(scores - m)
        attn = e * pl.reciprocal(jnp.sum(e, axis=-1, keepdims=True), approx=True)
        # dropout(p=0.1) on attn -> identity at inference.
        ctx_ref[:, hh * DK:(hh + 1) * DK] = jnp.dot(
            attn.astype(jnp.bfloat16), v_h, preferred_element_type=jnp.float32)

    ctx = ctx_ref[...].astype(jnp.bfloat16)            # (N, D): ctx[n, h*DK+d] = context[h, n, d]

    # --- torch's `context.transpose(1, 2).reshape(-1, H*d_v)` + fc + residual, done on the MXU
    #     and ACCUMULATED (no lane-axis concatenation):
    #       out = g + sum_blk (sel_blk @ ctx^T) @ wfc[blk*N:(blk+1)*N, :]
    acc = g
    for blk in range(NBLK):
        scr = jax.lax.dot_general(sel[blk * N:(blk + 1) * N, :], ctx,
                                  (((1,), (1,)), ((), ())),
                                  preferred_element_type=jnp.float32)      # (N, N)
        acc = acc + jnp.dot(scr.astype(jnp.bfloat16),
                            wfc[blk * N:(blk + 1) * N, :],
                            preferred_element_type=jnp.float32)
    out_ref[...] = acc


def _build_scramble_selectors():
    """One-hot matrices reproducing torch's `context.transpose(1,2).reshape(-1, H*d_v)`.

    Built once at init by literally simulating the PyTorch index shuffle on an index array,
    with a structural assert, so the kernel-side block-matmul formulation is correct by
    construction.  Returns sel of shape (NBLK*N, D) with
    sel[blk*N + p, u] = 1  iff  r[p, blk*N + n] = ctx[n, u].
    """
    assert D % N == 0 and H * DK == D
    ids = np.arange(H * N * DK).reshape(H, N, DK)         # flat id of context[h, n, d]
    r_ids = ids.transpose(0, 2, 1).reshape(N, H * DK)     # torch: transpose(1,2).reshape(-1,H*dv)
    sel = np.zeros((NBLK * N, H * DK), dtype=np.float32)
    for p in range(N):
        for c in range(H * DK):
            hh, rem = divmod(int(r_ids[p, c]), N * DK)
            n, d = divmod(rem, DK)
            blk, n_col = divmod(c, N)
            assert n_col == n, "scramble structure assumption violated"
            sel[blk * N + p, hh * DK + d] = 1.0
    return sel


def pack_encoder_params(params):
    """ONE-TIME host-side packing (call at init, reuse the result across calls).

    Folds alpha into the adaptive-residual weight (w_ar + alpha*I) and 1/sqrt(d_k) into W_Q,
    concatenates all weights, builds the scramble selectors, replicates the biases to N rows,
    and lays everything out in a single lane-dense (SLAB_ROWS, 256) bf16 slab -> one DMA.
    """
    alpha, w_ar, b_ar, w1, b1, w2, b2, wq, wk, wv, wfc = params

    w_ar_eff = w_ar + alpha * jnp.eye(D, dtype=jnp.float32)                  # fold alpha*x
    w_glu = jnp.concatenate([w1, w2], axis=1)                                # (D, 2D)
    b_glu = jnp.concatenate([b1, b2], axis=1)                                # (1, 2D)
    w_qkv = jnp.concatenate([wq * (1.0 / math.sqrt(DK)), wk, wv], axis=1)    # (D, 3D)
    sel = jnp.asarray(_build_scramble_selectors())                           # (NBLK*N, D)

    slab = jnp.zeros((SLAB_ROWS, SLAB_COLS), jnp.float32)
    slab = slab.at[0:D, 0:D].set(w_ar_eff)
    slab = slab.at[0:D, D:3 * D].set(w_glu)
    slab = slab.at[0:D, 3 * D:6 * D].set(w_qkv)
    slab = slab.at[0:D, 6 * D:7 * D].set(wfc)
    slab = slab.at[0:D, 7 * D:8 * D].set(sel)
    slab = slab.at[D:D + N, 0:D].set(jnp.tile(b_ar, (N, 1)))                 # replicated biases
    slab = slab.at[D:D + N, D:3 * D].set(jnp.tile(b_glu, (N, 1)))
    return slab.astype(jnp.bfloat16)                                         # bf16 MXU operands


_VMEM = pl.BlockSpec(memory_space=pltpu.MemorySpace.VMEM)

_COST = pl.CostEstimate(
    flops=(2 * N * D * (D + 2 * D + 3 * D)            # adaptive-res + SwiGLU + QKV matmuls
           + H * 4 * N * N * DK                       # per-head scores + context
           + NBLK * 4 * N * N * D                     # scramble selection + fc block matmuls
           + 2 * N * D),                              # residual add
    transcendentals=N * D + H * N * N + H * N,        # sigmoid exp + softmax exp + reciprocals
    bytes_accessed=4 * N * D + 2 * SLAB_ROWS * SLAB_COLS + 4 * N * D)


@jax.jit
def encoder_layer(x, w_packed):
    """Per-call path: exactly one pallas_call with two VMEM inputs (x + packed weight slab)."""
    return pl.pallas_call(
        _encoder_layer_kernel,
        out_shape=jax.ShapeDtypeStruct((N, D), jnp.float32),
        in_specs=[_VMEM, _VMEM],
        out_specs=_VMEM,
        scratch_shapes=[pltpu.VMEM((N, D), jnp.float32)],   # per-head context columns
        cost_estimate=_COST,
    )(x, w_packed)


def encoder_ref(x, params):
    """Pure-JAX f32 reference mirroring the PyTorch forward (eval mode), including the
    intentional `transpose(1, 2)` on the (H, N, d_k) context tensor."""
    alpha, w_ar, b_ar, w1, b1, w2, b2, wq, wk, wv, wfc = params
    h = x @ w_ar + b_ar + alpha * x
    g = (h @ w1 + b1) * jax.nn.sigmoid(h @ w2 + b2)
    q = (g @ wq).reshape(-1, H, DK).transpose(1, 0, 2)
    k = (g @ wk).reshape(-1, H, DK).transpose(1, 0, 2)
    v = (g @ wv).reshape(-1, H, DK).transpose(1, 0, 2)
    scores = jnp.einsum('hnd,hmd->hnm', q, k) / jnp.sqrt(jnp.float32(DK))
    attn = jax.nn.softmax(scores, axis=-1)
    ctx = jnp.einsum('hnm,hmd->hnd', attn, v)
    r = jnp.transpose(ctx, (0, 2, 1)).reshape(-1, H * DK)   # torch's scrambled reshape
    return g + r @ wfc


def make_params(key):
    ks = jax.random.split(key, 10)
    f = jnp.float32
    w_ar = 0.1 * jax.random.normal(ks[0], (D, D), f)
    b_ar = 0.1 * jax.random.normal(ks[1], (1, D), f)
    w1 = 0.1 * jax.random.normal(ks[2], (D, D), f)
    b1 = 0.1 * jax.random.normal(ks[3], (1, D), f)
    w2 = 0.1 * jax.random.normal(ks[4], (D, D), f)
    b2 = 0.1 * jax.random.normal(ks[5], (1, D), f)
    wq = 0.1 * jax.random.normal(ks[6], (D, D), f)
    wk = 0.1 * jax.random.normal(ks[7], (D, D), f)
    wv = 0.1 * jax.random.normal(ks[8], (D, D), f)
    wfc = 0.1 * jax.random.normal(ks[9], (D, D), f)
    alpha = jnp.float32(0.6)                          # torch.nn.Parameter(tensor(0.6))
    return (alpha, w_ar, b_ar, w1, b1, w2, b2, wq, wk, wv, wfc)


if __name__ == "__main__":
    key = jax.random.PRNGKey(0)
    k_x, k_p = jax.random.split(key)
    x = jax.random.normal(k_x, (N, D), jnp.float32)
    params = make_params(k_p)

    # One-time init-time packing (hoisted out of the per-call path).
    w_packed = jax.block_until_ready(pack_encoder_params(params))

    out = jax.block_until_ready(encoder_layer(x, w_packed))
    ref = jax.block_until_ready(encoder_ref(x, params))
    # bf16 MXU operands + approx reciprocal -> loosened tolerance vs the f32 reference.
    np.testing.assert_allclose(np.asarray(out), np.asarray(ref), atol=2e-2, rtol=2e-2)

    print("KERNEL_OK")
</pallas_src>

<mosaic_0001>
module attributes {stable_mosaic.version = 11 : i64} {
  func.func @_encoder_layer_kernel(%arg0: memref<8x32xf32, #tpu.memory_space<vmem>>, %arg1: memref<40x256xbf16, #tpu.memory_space<vmem>>, %arg2: memref<8x32xf32, #tpu.memory_space<vmem>>, %arg3: memref<8x32xf32, #tpu.memory_space<vmem>>) attributes {dimension_semantics = [], scalar_prefetch = 0 : i64, scratch_operands = 1 : i64, tpu.core_type = #tpu.core_type<tc>} {
    %c0 = arith.constant 0 : index
    %c0_0 = arith.constant 0 : index
    %0 = vector.load %arg0[%c0, %c0_0] : memref<8x32xf32, #tpu.memory_space<vmem>>, vector<8x32xf32>
    %1 = arith.truncf %0 : vector<8x32xf32> to vector<8x32xbf16>
    %c0_1 = arith.constant 0 : index
    %c0_2 = arith.constant 0 : index
    %2 = vector.load %arg1[%c0_1, %c0_2] : memref<40x256xbf16, #tpu.memory_space<vmem>>, vector<32x32xbf16>
    %c0_3 = arith.constant 0 : index
    %c32 = arith.constant 32 : index
    %3 = vector.load %arg1[%c0_3, %c32] : memref<40x256xbf16, #tpu.memory_space<vmem>>, vector<32x64xbf16>
    %c0_4 = arith.constant 0 : index
    %c96 = arith.constant 96 : index
    %4 = vector.load %arg1[%c0_4, %c96] : memref<40x256xbf16, #tpu.memory_space<vmem>>, vector<32x96xbf16>
    %c0_5 = arith.constant 0 : index
    %c192 = arith.constant 192 : index
    %5 = vector.load %arg1[%c0_5, %c192] : memref<40x256xbf16, #tpu.memory_space<vmem>>, vector<32x32xbf16>
    %c0_6 = arith.constant 0 : index
    %c224 = arith.constant 224 : index
    %6 = vector.load %arg1[%c0_6, %c224] : memref<40x256xbf16, #tpu.memory_space<vmem>>, vector<32x32xbf16>
    %c32_7 = arith.constant 32 : index
    %c0_8 = arith.constant 0 : index
    %7 = vector.load %arg1[%c32_7, %c0_8] : memref<40x256xbf16, #tpu.memory_space<vmem>>, vector<8x32xbf16>
    %8 = arith.extf %7 : vector<8x32xbf16> to vector<8x32xf32>
    %c32_9 = arith.constant 32 : index
    %c32_10 = arith.constant 32 : index
    %9 = vector.load %arg1[%c32_9, %c32_10] : memref<40x256xbf16, #tpu.memory_space<vmem>>, vector<8x64xbf16>
    %10 = arith.extf %9 : vector<8x64xbf16> to vector<8x64xf32>
    %cst = arith.constant dense<0.000000e+00> : vector<8x32xf32>
    %11 = tpu.matmul %1, %2, %cst {dimension_numbers = #tpu.dot_dimension_numbers<[1], [0], [0], [1], [0, 0, 1, 1], [], []>} : vector<8x32xbf16>, vector<32x32xbf16>, vector<8x32xf32> -> vector<8x32xf32>
    %12 = arith.addf %11, %8 : vector<8x32xf32>
    %13 = arith.truncf %12 : vector<8x32xf32> to vector<8x32xbf16>
    %cst_11 = arith.constant dense<0.000000e+00> : vector<8x64xf32>
    %14 = tpu.matmul %13, %3, %cst_11 {dimension_numbers = #tpu.dot_dimension_numbers<[1], [0], [0], [1], [0, 0, 1, 1], [], []>} : vector<8x32xbf16>, vector<32x64xbf16>, vector<8x64xf32> -> vector<8x64xf32>
    %15 = arith.addf %14, %10 : vector<8x64xf32>
    %16 = vector.extract_strided_slice %15 {offsets = [0, 0], sizes = [8, 32], strides = [1, 1]} : vector<8x64xf32> to vector<8x32xf32>
    %17 = vector.extract_strided_slice %15 {offsets = [0, 32], sizes = [8, 32], strides = [1, 1]} : vector<8x64xf32> to vector<8x32xf32>
    %cst_12 = arith.constant 0.000000e+00 : f32
    %18 = vector.broadcast %cst_12 : f32 to vector<8x32xf32>
    %19 = arith.subf %18, %17 : vector<8x32xf32>
    %20 = math.exp %19 : vector<8x32xf32>
    %cst_13 = arith.constant 1.000000e+00 : f32
    %21 = vector.broadcast %cst_13 : f32 to vector<8x32xf32>
    %22 = arith.addf %21, %20 : vector<8x32xf32>
    %cst_14 = arith.constant 1.000000e+00 : f32
    %23 = vector.broadcast %cst_14 : f32 to vector<8x32xf32>
    %24 = arith.divf %23, %22 : vector<8x32xf32>
    %25 = arith.mulf %16, %24 : vector<8x32xf32>
    %26 = arith.truncf %25 : vector<8x32xf32> to vector<8x32xbf16>
    %cst_15 = arith.constant dense<0.000000e+00> : vector<8x96xf32>
    %27 = tpu.matmul %26, %4, %cst_15 {dimension_numbers = #tpu.dot_dimension_numbers<[1], [0], [0], [1], [0, 0, 1, 1], [], []>} : vector<8x32xbf16>, vector<32x96xbf16>, vector<8x96xf32> -> vector<8x96xf32>
    %28 = vector.extract_strided_slice %27 {offsets = [0, 0], sizes = [8, 8], strides = [1, 1]} : vector<8x96xf32> to vector<8x8xf32>
    %29 = arith.truncf %28 : vector<8x8xf32> to vector<8x8xbf16>
    %30 = vector.extract_strided_slice %27 {offsets = [0, 32], sizes = [8, 8], strides = [1, 1]} : vector<8x96xf32> to vector<8x8xf32>
    %31 = arith.truncf %30 : vector<8x8xf32> to vector<8x8xbf16>
    %32 = vector.extract_strided_slice %27 {offsets = [0, 64], sizes = [8, 8], strides = [1, 1]} : vector<8x96xf32> to vector<8x8xf32>
    %33 = arith.truncf %32 : vector<8x8xf32> to vector<8x8xbf16>
    %cst_16 = arith.constant dense<0.000000e+00> : vector<8x8xf32>
    %34 = tpu.matmul %29, %31, %cst_16 {dimension_numbers = #tpu.dot_dimension_numbers<[1], [1], [0], [0], [0, 0, 1, 0], [], []>} : vector<8x8xbf16>, vector<8x8xbf16>, vector<8x8xf32> -> vector<8x8xf32>
    %cst_17 = arith.constant dense<0xFF800000> : vector<8xf32>
    %35 = vector.multi_reduction <maximumf>, %34, %cst_17 [1] : vector<8x8xf32> to vector<8xf32>
    %36 = vector.shape_cast %35 : vector<8xf32> to vector<8x1xf32>
    %37 = vector.broadcast %36 : vector<8x1xf32> to vector<8x8xf32>
    %38 = arith.subf %34, %37 : vector<8x8xf32>
    %39 = math.exp %38 : vector<8x8xf32>
    %cst_18 = arith.constant dense<0.000000e+00> : vector<8xf32>
    %40 = vector.multi_reduction <add>, %39, %cst_18 [1] : vector<8x8xf32> to vector<8xf32>
    %41 = vector.shape_cast %40 : vector<8xf32> to vector<8x1xf32>
    %42 = tpu.reciprocal %41 {approx = true} : vector<8x1xf32> -> vector<8x1xf32>
    %43 = vector.broadcast %42 : vector<8x1xf32> to vector<8x8xf32>
    %44 = arith.mulf %39, %43 : vector<8x8xf32>
    %45 = arith.truncf %44 : vector<8x8xf32> to vector<8x8xbf16>
    %cst_19 = arith.constant dense<0.000000e+00> : vector<8x8xf32>
    %46 = tpu.matmul %45, %33, %cst_19 {dimension_numbers = #tpu.dot_dimension_numbers<[1], [0], [0], [1], [0, 0, 1, 1], [], []>} : vector<8x8xbf16>, vector<8x8xbf16>, vector<8x8xf32> -> vector<8x8xf32>
    %c0_20 = arith.constant 0 : index
    %c0_21 = arith.constant 0 : index
    %47 = vector.load %arg3[%c0_20, %c0_21] : memref<8x32xf32, #tpu.memory_space<vmem>>, vector<8x8xf32>
    tpu.vector_store %arg3[%c0_20, %c0_21], %46 {strides = array<i32>} : memref<8x32xf32, #tpu.memory_space<vmem>>, vector<8x8xf32>,
    %48 = vector.extract_strided_slice %27 {offsets = [0, 8], sizes = [8, 8], strides = [1, 1]} : vector<8x96xf32> to vector<8x8xf32>
    %49 = arith.truncf %48 : vector<8x8xf32> to vector<8x8xbf16>
    %50 = vector.extract_strided_slice %27 {offsets = [0, 40], sizes = [8, 8], strides = [1, 1]} : vector<8x96xf32> to vector<8x8xf32>
    %51 = arith.truncf %50 : vector<8x8xf32> to vector<8x8xbf16>
    %52 = vector.extract_strided_slice %27 {offsets = [0, 72], sizes = [8, 8], strides = [1, 1]} : vector<8x96xf32> to vector<8x8xf32>
    %53 = arith.truncf %52 : vector<8x8xf32> to vector<8x8xbf16>
    %cst_22 = arith.constant dense<0.000000e+00> : vector<8x8xf32>
    %54 = tpu.matmul %49, %51, %cst_22 {dimension_numbers = #tpu.dot_dimension_numbers<[1], [1], [0], [0], [0, 0, 1, 0], [], []>} : vector<8x8xbf16>, vector<8x8xbf16>, vector<8x8xf32> -> vector<8x8xf32>
    %cst_23 = arith.constant dense<0xFF800000> : vector<8xf32>
    %55 = vector.multi_reduction <maximumf>, %54, %cst_23 [1] : vector<8x8xf32> to vector<8xf32>
    %56 = vector.shape_cast %55 : vector<8xf32> to vector<8x1xf32>
    %57 = vector.broadcast %56 : vector<8x1xf32> to vector<8x8xf32>
    %58 = arith.subf %54, %57 : vector<8x8xf32>
    %59 = math.exp %58 : vector<8x8xf32>
    %cst_24 = arith.constant dense<0.000000e+00> : vector<8xf32>
    %60 = vector.multi_reduction <add>, %59, %cst_24 [1] : vector<8x8xf32> to vector<8xf32>
    %61 = vector.shape_cast %60 : vector<8xf32> to vector<8x1xf32>
    %62 = tpu.reciprocal %61 {approx = true} : vector<8x1xf32> -> vector<8x1xf32>
    %63 = vector.broadcast %62 : vector<8x1xf32> to vector<8x8xf32>
    %64 = arith.mulf %59, %63 : vector<8x8xf32>
    %65 = arith.truncf %64 : vector<8x8xf32> to vector<8x8xbf16>
    %cst_25 = arith.constant dense<0.000000e+00> : vector<8x8xf32>
    %66 = tpu.matmul %65, %53, %cst_25 {dimension_numbers = #tpu.dot_dimension_numbers<[1], [0], [0], [1], [0, 0, 1, 1], [], []>} : vector<8x8xbf16>, vector<8x8xbf16>, vector<8x8xf32> -> vector<8x8xf32>
    %c0_26 = arith.constant 0 : index
    %c8 = arith.constant 8 : index
    %67 = vector.load %arg3[%c0_26, %c8] : memref<8x32xf32, #tpu.memory_space<vmem>>, vector<8x8xf32>
    tpu.vector_store %arg3[%c0_26, %c8], %66 {strides = array<i32>} : memref<8x32xf32, #tpu.memory_space<vmem>>, vector<8x8xf32>,
    %68 = vector.extract_strided_slice %27 {offsets = [0, 16], sizes = [8, 8], strides = [1, 1]} : vector<8x96xf32> to vector<8x8xf32>
    %69 = arith.truncf %68 : vector<8x8xf32> to vector<8x8xbf16>
    %70 = vector.extract_strided_slice %27 {offsets = [0, 48], sizes = [8, 8], strides = [1, 1]} : vector<8x96xf32> to vector<8x8xf32>
    %71 = arith.truncf %70 : vector<8x8xf32> to vector<8x8xbf16>
    %72 = vector.extract_strided_slice %27 {offsets = [0, 80], sizes = [8, 8], strides = [1, 1]} : vector<8x96xf32> to vector<8x8xf32>
    %73 = arith.truncf %72 : vector<8x8xf32> to vector<8x8xbf16>
    %cst_27 = arith.constant dense<0.000000e+00> : vector<8x8xf32>
    %74 = tpu.matmul %69, %71, %cst_27 {dimension_numbers = #tpu.dot_dimension_numbers<[1], [1], [0], [0], [0, 0, 1, 0], [], []>} : vector<8x8xbf16>, vector<8x8xbf16>, vector<8x8xf32> -> vector<8x8xf32>
    %cst_28 = arith.constant dense<0xFF800000> : vector<8xf32>
    %75 = vector.multi_reduction <maximumf>, %74, %cst_28 [1] : vector<8x8xf32> to vector<8xf32>
    %76 = vector.shape_cast %75 : vector<8xf32> to vector<8x1xf32>
    %77 = vector.broadcast %76 : vector<8x1xf32> to vector<8x8xf32>
    %78 = arith.subf %74, %77 : vector<8x8xf32>
    %79 = math.exp %78 : vector<8x8xf32>
    %cst_29 = arith.constant dense<0.000000e+00> : vector<8xf32>
    %80 = vector.multi_reduction <add>, %79, %cst_29 [1] : vector<8x8xf32> to vector<8xf32>
    %81 = vector.shape_cast %80 : vector<8xf32> to vector<8x1xf32>
    %82 = tpu.reciprocal %81 {approx = true} : vector<8x1xf32> -> vector<8x1xf32>
    %83 = vector.broadcast %82 : vector<8x1xf32> to vector<8x8xf32>
    %84 = arith.mulf %79, %83 : vector<8x8xf32>
    %85 = arith.truncf %84 : vector<8x8xf32> to vector<8x8xbf16>
    %cst_30 = arith.constant dense<0.000000e+00> : vector<8x8xf32>
    %86 = tpu.matmul %85, %73, %cst_30 {dimension_numbers = #tpu.dot_dimension_numbers<[1], [0], [0], [1], [0, 0, 1, 1], [], []>} : vector<8x8xbf16>, vector<8x8xbf16>, vector<8x8xf32> -> vector<8x8xf32>
    %c0_31 = arith.constant 0 : index
    %c16 = arith.constant 16 : index
    %87 = vector.load %arg3[%c0_31, %c16] : memref<8x32xf32, #tpu.memory_space<vmem>>, vector<8x8xf32>
    tpu.vector_store %arg3[%c0_31, %c16], %86 {strides = array<i32>} : memref<8x32xf32, #tpu.memory_space<vmem>>, vector<8x8xf32>,
    %88 = vector.extract_strided_slice %27 {offsets = [0, 24], sizes = [8, 8], strides = [1, 1]} : vector<8x96xf32> to vector<8x8xf32>
    %89 = arith.truncf %88 : vector<8x8xf32> to vector<8x8xbf16>
    %90 = vector.extract_strided_slice %27 {offsets = [0, 56], sizes = [8, 8], strides = [1, 1]} : vector<8x96xf32> to vector<8x8xf32>
    %91 = arith.truncf %90 : vector<8x8xf32> to vector<8x8xbf16>
    %92 = vector.extract_strided_slice %27 {offsets = [0, 88], sizes = [8, 8], strides = [1, 1]} : vector<8x96xf32> to vector<8x8xf32>
    %93 = arith.truncf %92 : vector<8x8xf32> to vector<8x8xbf16>
    %cst_32 = arith.constant dense<0.000000e+00> : vector<8x8xf32>
    %94 = tpu.matmul %89, %91, %cst_32 {dimension_numbers = #tpu.dot_dimension_numbers<[1], [1], [0], [0], [0, 0, 1, 0], [], []>} : vector<8x8xbf16>, vector<8x8xbf16>, vector<8x8xf32> -> vector<8x8xf32>
    %cst_33 = arith.constant dense<0xFF800000> : vector<8xf32>
    %95 = vector.multi_reduction <maximumf>, %94, %cst_33 [1] : vector<8x8xf32> to vector<8xf32>
    %96 = vector.shape_cast %95 : vector<8xf32> to vector<8x1xf32>
    %97 = vector.broadcast %96 : vector<8x1xf32> to vector<8x8xf32>
    %98 = arith.subf %94, %97 : vector<8x8xf32>
    %99 = math.exp %98 : vector<8x8xf32>
    %cst_34 = arith.constant dense<0.000000e+00> : vector<8xf32>
    %100 = vector.multi_reduction <add>, %99, %cst_34 [1] : vector<8x8xf32> to vector<8xf32>
    %101 = vector.shape_cast %100 : vector<8xf32> to vector<8x1xf32>
    %102 = tpu.reciprocal %101 {approx = true} : vector<8x1xf32> -> vector<8x1xf32>
    %103 = vector.broadcast %102 : vector<8x1xf32> to vector<8x8xf32>
    %104 = arith.mulf %99, %103 : vector<8x8xf32>
    %105 = arith.truncf %104 : vector<8x8xf32> to vector<8x8xbf16>
    %cst_35 = arith.constant dense<0.000000e+00> : vector<8x8xf32>
    %106 = tpu.matmul %105, %93, %cst_35 {dimension_numbers = #tpu.dot_dimension_numbers<[1], [0], [0], [1], [0, 0, 1, 1], [], []>} : vector<8x8xbf16>, vector<8x8xbf16>, vector<8x8xf32> -> vector<8x8xf32>
    %c0_36 = arith.constant 0 : index
    %c24 = arith.constant 24 : index
    %107 = vector.load %arg3[%c0_36, %c24] : memref<8x32xf32, #tpu.memory_space<vmem>>, vector<8x8xf32>
    tpu.vector_store %arg3[%c0_36, %c24], %106 {strides = array<i32>} : memref<8x32xf32, #tpu.memory_space<vmem>>, vector<8x8xf32>,
    %c0_37 = arith.constant 0 : index
    %c0_38 = arith.constant 0 : index
    %108 = vector.load %arg3[%c0_37, %c0_38] : memref<8x32xf32, #tpu.memory_space<vmem>>, vector<8x32xf32>
    %109 = arith.truncf %108 : vector<8x32xf32> to vector<8x32xbf16>
    %110 = vector.extract_strided_slice %6 {offsets = [0, 0], sizes = [8, 32], strides = [1, 1]} : vector<32x32xbf16> to vector<8x32xbf16>
    %cst_39 = arith.constant dense<0.000000e+00> : vector<8x8xf32>
    %111 = tpu.matmul %110, %109, %cst_39 {dimension_numbers = #tpu.dot_dimension_numbers<[1], [1], [0], [0], [0, 0, 1, 0], [], []>} : vector<8x32xbf16>, vector<8x32xbf16>, vector<8x8xf32> -> vector<8x8xf32>
    %112 = arith.truncf %111 : vector<8x8xf32> to vector<8x8xbf16>
    %113 = vector.extract_strided_slice %5 {offsets = [0, 0], sizes = [8, 32], strides = [1, 1]} : vector<32x32xbf16> to vector<8x32xbf16>
    %cst_40 = arith.constant dense<0.000000e+00> : vector<8x32xf32>
    %114 = tpu.matmul %112, %113, %cst_40 {dimension_numbers = #tpu.dot_dimension_numbers<[1], [0], [0], [1], [0, 0, 1, 1], [], []>} : vector<8x8xbf16>, vector<8x32xbf16>, vector<8x32xf32> -> vector<8x32xf32>
    %115 = arith.addf %25, %114 : vector<8x32xf32>
    %116 = vector.extract_strided_slice %6 {offsets = [8, 0], sizes = [8, 32], strides = [1, 1]} : vector<32x32xbf16> to vector<8x32xbf16>
    %cst_41 = arith.constant dense<0.000000e+00> : vector<8x8xf32>
    %117 = tpu.matmul %116, %109, %cst_41 {dimension_numbers = #tpu.dot_dimension_numbers<[1], [1], [0], [0], [0, 0, 1, 0], [], []>} : vector<8x32xbf16>, vector<8x32xbf16>, vector<8x8xf32> -> vector<8x8xf32>
    %118 = arith.truncf %117 : vector<8x8xf32> to vector<8x8xbf16>
    %119 = vector.extract_strided_slice %5 {offsets = [8, 0], sizes = [8, 32], strides = [1, 1]} : vector<32x32xbf16> to vector<8x32xbf16>
    %cst_42 = arith.constant dense<0.000000e+00> : vector<8x32xf32>
    %120 = tpu.matmul %118, %119, %cst_42 {dimension_numbers = #tpu.dot_dimension_numbers<[1], [0], [0], [1], [0, 0, 1, 1], [], []>} : vector<8x8xbf16>, vector<8x32xbf16>, vector<8x32xf32> -> vector<8x32xf32>
    %121 = arith.addf %115, %120 : vector<8x32xf32>
    %122 = vector.extract_strided_slice %6 {offsets = [16, 0], sizes = [8, 32], strides = [1, 1]} : vector<32x32xbf16> to vector<8x32xbf16>
    %cst_43 = arith.constant dense<0.000000e+00> : vector<8x8xf32>
    %123 = tpu.matmul %122, %109, %cst_43 {dimension_numbers = #tpu.dot_dimension_numbers<[1], [1], [0], [0], [0, 0, 1, 0], [], []>} : vector<8x32xbf16>, vector<8x32xbf16>, vector<8x8xf32> -> vector<8x8xf32>
    %124 = arith.truncf %123 : vector<8x8xf32> to vector<8x8xbf16>
    %125 = vector.extract_strided_slice %5 {offsets = [16, 0], sizes = [8, 32], strides = [1, 1]} : vector<32x32xbf16> to vector<8x32xbf16>
    %cst_44 = arith.constant dense<0.000000e+00> : vector<8x32xf32>
    %126 = tpu.matmul %124, %125, %cst_44 {dimension_numbers = #tpu.dot_dimension_numbers<[1], [0], [0], [1], [0, 0, 1, 1], [], []>} : vector<8x8xbf16>, vector<8x32xbf16>, vector<8x32xf32> -> vector<8x32xf32>
    %127 = arith.addf %121, %126 : vector<8x32xf32>
    %128 = vector.extract_strided_slice %6 {offsets = [24, 0], sizes = [8, 32], strides = [1, 1]} : vector<32x32xbf16> to vector<8x32xbf16>
    %cst_45 = arith.constant dense<0.000000e+00> : vector<8x8xf32>
    %129 = tpu.matmul %128, %109, %cst_45 {dimension_numbers = #tpu.dot_dimension_numbers<[1], [1], [0], [0], [0, 0, 1, 0], [], []>} : vector<8x32xbf16>, vector<8x32xbf16>, vector<8x8xf32> -> vector<8x8xf32>
    %130 = arith.truncf %129 : vector<8x8xf32> to vector<8x8xbf16>
    %131 = vector.extract_strided_slice %5 {offsets = [24, 0], sizes = [8, 32], strides = [1, 1]} : vector<32x32xbf16> to vector<8x32xbf16>
    %cst_46 = arith.constant dense<0.000000e+00> : vector<8x32xf32>
    %132 = tpu.matmul %130, %131, %cst_46 {dimension_numbers = #tpu.dot_dimension_numbers<[1], [0], [0], [1], [0, 0, 1, 1], [], []>} : vector<8x8xbf16>, vector<8x32xbf16>, vector<8x32xf32> -> vector<8x32xf32>
    %133 = arith.addf %127, %132 : vector<8x32xf32>
    %c0_47 = arith.constant 0 : index
    %c0_48 = arith.constant 0 : index
    %134 = vector.load %arg2[%c0_47, %c0_48] : memref<8x32xf32, #tpu.memory_space<vmem>>, vector<8x32xf32>
    tpu.vector_store %arg2[%c0_47, %c0_48], %133 {strides = array<i32>} : memref<8x32xf32, #tpu.memory_space<vmem>>, vector<8x32xf32>,
    return
  }
}

</mosaic_0001>

<llo_original>
// kernel: encoder_layer.1
$region0: #{encoder_layer.1}
  #allocation0 [shape = 'u32[]', space=smem, size = 0x4, offset = 0x4, fixed_abs, tag = 'smem constant byte address 0x4 - core index']
  #allocation1 [shape = 'u32[144,128]{1,0:T(1,128)}', space=vmem, size = 0x12000, scoped, tag = 'internal scratch']
  #allocation2 [shape = 'f32[8,32]{1,0:T(8,128)}', space=vmem, size = 0x1000, scoped, tag = 'scratch operand']
  %s0 = inlined_call_operand.hbm [shape: f32[8,32], index: 0, kind: input, shape index: {}]
  %s1 = inlined_call_operand.hbm [shape: bf16[40,256], index: 1, kind: input, shape index: {}]
  %s2 = inlined_call_operand.hbm [shape: f32[8,32], index: 2, kind: output, shape index: {}]
  %s3 = sld [smem:[#allocation0]]
  $region26: #{encoder_layer.1} parent=0
    _
  %s5 = ssub.s32 1, %s3
  %s6 = scalar_select 0, %s5, %s3
  $region1: #{encoder_layer.1} parent=0
    #allocation3 [shape = 'u8[4096]{0}', space=vmem, size = 0x1000, scoped, tag = 'input window, operand 0, single buffered']
    #allocation4 [shape = 's32[1]{0}', space=sflag, size = 0x4, scoped, tag = 'scoped memory for encoder_layer.1']
    #allocation5 [shape = 's32[1]{0}', space=sflag, size = 0x4, scoped, tag = 'scoped memory for encoder_layer.1']
    #allocation6 [shape = 'u8[20480]{0}', space=vmem, size = 0x5000, scoped, tag = 'input window, operand 1, single buffered']
    #allocation7 [shape = 's32[1]{0}', space=sflag, size = 0x4, scoped, tag = 'scoped memory for encoder_layer.1']
    #allocation8 [shape = 'u8[4096]{0}', space=vmem, size = 0x1000, scoped, tag = 'output window, operand 0, single buffered']
    %7 = vsyncpa [#allocation4], 0
    %8 = vsyncpa [#allocation7], 0
    %9 = vsyncpa [#allocation5], 0
    // Predicated region
    $region2: #{encoder_layer.1} parent=1 // pred_check
      _
    $region3: #{encoder_layer.1} parent=1 // pred_check_branch
      %11 = sbr.rel (0) target = $region5
    $region4: #{encoder_layer.1} parent=1 // pred_region
      %s13 = ssub.s32 128, 128
      %14 = vsyncadd [#allocation4], %s13
      %s16 = sshll.u32 [#allocation3], 4
      %s17 = int_to_ptr.vmem [resolvable:$true] %s16
      %19 = dma.hbm_to_vmem [thread:$0]  %s0, 128, %s17, [#allocation4]
    $region5: #{encoder_layer.1} parent=1 // pred_fallthru
      _
    // Predicated region
    $region6: #{encoder_layer.1} parent=1 // pred_check
      _
    $region7: #{encoder_layer.1} parent=1 // pred_check_branch
      %21 = sbr.rel (0) target = $region9
    $region8: #{encoder_layer.1} parent=1 // pred_region
      %s23 = ssub.s32 640, 640
      %24 = vsyncadd [#allocation7], %s23
      %s25 = sshll.u32 [#allocation6], 4
      %s26 = int_to_ptr.vmem [resolvable:$true] %s25
      %31 = dma.hbm_to_vmem [thread:$0]  %s1, 640, %s26, [#allocation7], 128, 128, 8
    $region9: #{encoder_layer.1} parent=1 // pred_fallthru
      _
    // Predicated region
    $region10: #{encoder_layer.1} parent=1 // pred_check
      _
    $region11: #{encoder_layer.1} parent=1 // pred_check_branch
      %33 = sbr.rel (0) target = $region13
    $region12: #{encoder_layer.1} parent=1 // pred_region
      %34 = dma.done [#allocation4], 128
    $region13: #{encoder_layer.1} parent=1 // pred_fallthru
      _
    // Predicated region
    $region14: #{encoder_layer.1} parent=1 // pred_check
      _
    $region15: #{encoder_layer.1} parent=1 // pred_check_branch
      %36 = sbr.rel (0) target = $region17
    $region16: #{encoder_layer.1} parent=1 // pred_region
      %37 = dma.done [#allocation7], 640
    $region17: #{encoder_layer.1} parent=1 // pred_fallthru
      _
    %v39 = vld [vmem:[#allocation3] sm:$0xff]
    %v40 = vpack.c.bf16 %v39, %v39
    %v41 = vld [vmem:[#allocation6] sm:$0xf]
    %v42 = vld [vmem:[#allocation6 + $0x8] sm:$0xf]
    %v43 = vld [vmem:[#allocation6 + $0x10] sm:$0xf]
    %v44 = vld [vmem:[#allocation6 + $0x18] sm:$0xf]
    %v45 = vld [vmem:[#allocation6] sm:$0xff]
    %v46 = vld [vmem:[#allocation6 + $0x8] sm:$0xff]
    %v47 = vld [vmem:[#allocation6 + $0x10] sm:$0xff]
    %v48 = vld [vmem:[#allocation6 + $0x18] sm:$0xff]
    %v49 = vld [vmem:[#allocation6 + $0x4] sm:$0xf]
    %v50 = vld [vmem:[#allocation6 + $0xc] sm:$0xf]
    %v51 = vld [vmem:[#allocation6 + $0x14] sm:$0xf]
    %v52 = vld [vmem:[#allocation6 + $0x1c] sm:$0xf]
    %v53 = vld [vmem:[#allocation6 + $0x20] sm:$0xf]
    %v54 = vunpack.c.l.bf16 %v53
    %v59 = vunpack.c.l.b16 %v41
    %v60 = vunpack.c.l.b16 %v42
    %v61 = vunpack.c.l.b16 %v43
    %v62 = vunpack.c.l.b16 %v44
    %v63 = vpack.c.b16 %v60, %v59
    %v64 = vpack.c.b16 %v62, %v61
    %vm67 = vcmask 261120
    %v69 = vsel %vm67, %v40, 0
    %71 = vmatprep.subr.bf16.mxu0 0
    %72 = vmatpush1.bf16.msra.mxu0 %v63
    %73 = vmatprep.subr.bf16.mxu0 0
    %74 = vmatpush1.bf16.msra.mxu0 %v64
    %75 = vmatprep.subr.bf16.mxu0 0
    %76 = vmatpush1.bf16.msra.mxu0 0
    %77 = vmatprep.subr.bf16.mxu0 0
    %78 = vmatpush1.bf16.msra.mxu0 0
    %79 = vmatprep.subr.bf16.mxu0 0
    %80 = vmatpush1.bf16.msra.mxu0 0
    %81 = vmatprep.subr.bf16.mxu0 0
    %82 = vmatpush1.bf16.msra.mxu0 0
    %83 = vmatprep.subr.bf16.mxu0 0
    %84 = vmatpush1.bf16.msra.mxu0 0
    %85 = vmatprep.subr.bf16.mxu0 0
    %86 = vmatpush1.bf16.msra.mxu0 0
    %87 = vmatprep.subr.bf16.mxu0 0
    %88 = vmatpush1.bf16.msra.mxu0 0
    %89 = vmatprep.subr.bf16.mxu0 0
    %90 = vmatpush1.bf16.msra.mxu0 0
    %91 = vmatprep.subr.bf16.mxu0 0
    %92 = vmatpush1.bf16.msra.mxu0 0
    %93 = vmatprep.subr.bf16.mxu0 0
    %94 = vmatpush1.bf16.msra.mxu0 0
    %95 = vmatprep.subr.bf16.mxu0 0
    %96 = vmatpush1.bf16.msra.mxu0 0
    %97 = vmatprep.subr.bf16.mxu0 0
    %98 = vmatpush1.bf16.msra.mxu0 0
    %99 = vmatprep.subr.bf16.mxu0 0
    %100 = vmatpush1.bf16.msra.mxu0 0
    %101 = vmatprep.subr.bf16.mxu0 0
    %102 = vmatpush1.bf16.msra.mxu0 0
    %103 = vmatprep.mubr.bf16.mxu0 0
    %104 = vmatmul.mubr.bf16.gmra.mrb[0].mxu0 %v69
    %v105 = vpop.f32.mrb[0].mxu0
    %v106 = vadd.f32 %v54, %v105
    %v107 = vpop.f32.mrb[0].mxu0
    %v108 = vpop.f32.mrb[0].mxu0
    %v109 = vpop.f32.mrb[0].mxu0
    %110 = vdwg.mxu0
    %v111 = vpack.c.bf16 %v106, %v106
    %112 = vrot.lane.b32.xlu0 %v63, 96
    %v113 = vpop.permute.xlu0 %112
    %114 = vrot.lane.b32.xlu0 %v64, 96
    %v115 = vpop.permute.xlu0 %114
    %119 = vrot.lane.b32.xlu0 %v54, 96
    %v120 = vpop.permute.xlu0 %119
    %v123 = vsel %vm67, %v111, 0
    %125 = vmatprep.subr.bf16.mxu0 0
    %126 = vmatpush1.bf16.msra.mxu0 %v113
    %127 = vmatprep.subr.bf16.mxu0 0
    %128 = vmatpush1.bf16.msra.mxu0 %v115
    %129 = vmatprep.subr.bf16.mxu0 0
    %130 = vmatpush1.bf16.msra.mxu0 0
    %131 = vmatprep.subr.bf16.mxu0 0
    %132 = vmatpush1.bf16.msra.mxu0 0
    %133 = vmatprep.subr.bf16.mxu0 0
    %134 = vmatpush1.bf16.msra.mxu0 0
    %135 = vmatprep.subr.bf16.mxu0 0
    %136 = vmatpush1.bf16.msra.mxu0 0
    %137 = vmatprep.subr.bf16.mxu0 0
    %138 = vmatpush1.bf16.msra.mxu0 0
    %139 = vmatprep.subr.bf16.mxu0 0
    %140 = vmatpush1.bf16.msra.mxu0 0
    %141 = vmatprep.subr.bf16.mxu0 0
    %142 = vmatpush1.bf16.msra.mxu0 0
    %143 = vmatprep.subr.bf16.mxu0 0
    %144 = vmatpush1.bf16.msra.mxu0 0
    %145 = vmatprep.subr.bf16.mxu0 0
    %146 = vmatpush1.bf16.msra.mxu0 0
    %147 = vmatprep.subr.bf16.mxu0 0
    %148 = vmatpush1.bf16.msra.mxu0 0
    %149 = vmatprep.subr.bf16.mxu0 0
    %150 = vmatpush1.bf16.msra.mxu0 0
    %151 = vmatprep.subr.bf16.mxu0 0
    %152 = vmatpush1.bf16.msra.mxu0 0
    %153 = vmatprep.subr.bf16.mxu0 0
    %154 = vmatpush1.bf16.msra.mxu0 0
    %155 = vmatprep.subr.bf16.mxu0 0
    %156 = vmatpush1.bf16.msra.mxu0 0
    %157 = vmatprep.mubr.bf16.mxu0 0
    %158 = vmatmul.mubr.bf16.gmra.mrb[0].mxu0 %v123
    %v159 = vpop.f32.mrb[0].mxu0
    %v160 = vadd.f32 %v120, %v159
    %v161 = vpop.f32.mrb[0].mxu0
    %v162 = vpop.f32.mrb[0].mxu0
    %v163 = vpop.f32.mrb[0].mxu0
    %164 = vdwg.mxu0
    %v165 = vsub.f32 0.0, %v160
    %v166 = vmul.f32 %v165, 1.442695
    %v167 = vpow.pop %v166
    %v168 = vadd.f32 %v167, 1.0
    %v169 = vrcp.pop %v168
    %v170 = vmul.f32 1.0, %v169
    %172 = vrot.lane.b32.xlu0 %v170, 96
    %v173 = vpop.permute.xlu0 %172
    %v175 = vmul.f32 %v160, %v173
    %v176 = vpack.c.bf16 %v175, %v175
    %v181 = vunpack.c.l.b16 %v45
    %v182 = vunpack.c.h.b16 %v45
    %v183 = vunpack.c.l.b16 %v46
    %v184 = vunpack.c.h.b16 %v46
    %v185 = vunpack.c.l.b16 %v47
    %v186 = vunpack.c.h.b16 %v47
    %v187 = vunpack.c.l.b16 %v48
    %v188 = vunpack.c.h.b16 %v48
    %v189 = vpack.c.b16 %v183, %v181
    %v190 = vpack.c.b16 %v184, %v182
    %v191 = vpack.c.b16 %v187, %v185
    %v192 = vpack.c.b16 %v188, %v186
    %193 = vrot.lane.b32.xlu0 %v189, 32
    %v194 = vpop.permute.xlu0 %193
    %195 = vrot.lane.b32.xlu0 %v190, 32
    %v196 = vpop.permute.xlu0 %195
    %197 = vrot.lane.b32.xlu0 %v191, 32
    %v198 = vpop.permute.xlu0 %197
    %199 = vrot.lane.b32.xlu0 %v192, 32
    %v200 = vpop.permute.xlu0 %199
    %vm201 = vcmask 261120
    %v202 = vsel %vm201, %v194, %v196
    %v203 = vsel %vm201, %v198, %v200
    %v207 = vsel %vm67, %v176, 0
    %209 = vmatprep.subr.bf16.mxu0 0
    %210 = vmatpush1.bf16.msra.mxu0 %v202
    %211 = vmatprep.subr.bf16.mxu0 0
    %212 = vmatpush1.bf16.msra.mxu0 %v203
    %213 = vmatprep.subr.bf16.mxu0 0
    %214 = vmatpush1.bf16.msra.mxu0 0
    %215 = vmatprep.subr.bf16.mxu0 0
    %216 = vmatpush1.bf16.msra.mxu0 0
    %217 = vmatprep.subr.bf16.mxu0 0
    %218 = vmatpush1.bf16.msra.mxu0 0
    %219 = vmatprep.subr.bf16.mxu0 0
    %220 = vmatpush1.bf16.msra.mxu0 0
    %221 = vmatprep.subr.bf16.mxu0 0
    %222 = vmatpush1.bf16.msra.mxu0 0
    %223 = vmatprep.subr.bf16.mxu0 0
    %224 = vmatpush1.bf16.msra.mxu0 0
    %225 = vmatprep.subr.bf16.mxu0 0
    %226 = vmatpush1.bf16.msra.mxu0 0
    %227 = vmatprep.subr.bf16.mxu0 0
    %228 = vmatpush1.bf16.msra.mxu0 0
    %229 = vmatprep.subr.bf16.mxu0 0
    %230 = vmatpush1.bf16.msra.mxu0 0
    %231 = vmatprep.subr.bf16.mxu0 0
    %232 = vmatpush1.bf16.msra.mxu0 0
    %233 = vmatprep.subr.bf16.mxu0 0
    %234 = vmatpush1.bf16.msra.mxu0 0
    %235 = vmatprep.subr.bf16.mxu0 0
    %236 = vmatpush1.bf16.msra.mxu0 0
    %237 = vmatprep.subr.bf16.mxu0 0
    %238 = vmatpush1.bf16.msra.mxu0 0
    %239 = vmatprep.subr.bf16.mxu0 0
    %240 = vmatpush1.bf16.msra.mxu0 0
    %241 = vmatprep.mubr.bf16.mxu0 0
    %242 = vmatmul.mubr.bf16.gmra.mrb[0].mxu0 %v207
    %v243 = vpop.f32.mrb[0].mxu0
    %v244 = vadd.f32 0.0, %v243
    %v245 = vpop.f32.mrb[0].mxu0
    %v246 = vpop.f32.mrb[0].mxu0
    %v247 = vpop.f32.mrb[0].mxu0
    %248 = vdwg.mxu0
    %v249 = vpack.c.bf16 %v244, %v244
    %251 = vrot.lane.b32.xlu0 %v249, 96
    %v252 = vpop.permute.xlu0 %251
    %vm253 = vcmask 64512
    %v255 = vsel %vm253, %v249, 0
    %v258 = vsel %vm253, %v252, 0
    %260 = vmatprep.subr.bf16.mxu0 0
    %261 = vmatpush1.bf16.xpose.msra.mxu0 %v258
    %262 = vmatprep.subr.bf16.mxu0 0
    %263 = vmatpush1.bf16.xpose.msra.mxu0 0
    %264 = vmatprep.subr.bf16.mxu0 0
    %265 = vmatpush1.bf16.xpose.msra.mxu0 0
    %266 = vmatprep.subr.bf16.mxu0 0
    %267 = vmatpush1.bf16.xpose.msra.mxu0 0
    %268 = vmatprep.subr.bf16.mxu0 0
    %269 = vmatpush1.bf16.xpose.msra.mxu0 0
    %270 = vmatprep.subr.bf16.mxu0 0
    %271 = vmatpush1.bf16.xpose.msra.mxu0 0
    %272 = vmatprep.subr.bf16.mxu0 0
    %273 = vmatpush1.bf16.xpose.msra.mxu0 0
    %274 = vmatprep.subr.bf16.mxu0 0
    %275 = vmatpush1.bf16.xpose.msra.mxu0 0
    %276 = vmatprep.subr.bf16.mxu0 0
    %277 = vmatpush1.bf16.xpose.msra.mxu0 0
    %278 = vmatprep.subr.bf16.mxu0 0
    %279 = vmatpush1.bf16.xpose.msra.mxu0 0
    %280 = vmatprep.subr.bf16.mxu0 0
    %281 = vmatpush1.bf16.xpose.msra.mxu0 0
    %282 = vmatprep.subr.bf16.mxu0 0
    %283 = vmatpush1.bf16.xpose.msra.mxu0 0
    %284 = vmatprep.subr.bf16.mxu0 0
    %285 = vmatpush1.bf16.xpose.msra.mxu0 0
    %286 = vmatprep.subr.bf16.mxu0 0
    %287 = vmatpush1.bf16.xpose.msra.mxu0 0
    %288 = vmatprep.subr.bf16.mxu0 0
    %289 = vmatpush1.bf16.xpose.msra.mxu0 0
    %290 = vmatprep.subr.bf16.mxu0 0
    %291 = vmatpush1.bf16.xpose.msra.mxu0 0
    %292 = vmatprep.mubr.bf16.mxu0 0
    %293 = vmatmul.mubr.bf16.gmra.mrb[0].mxu0 %v255
    %v294 = vpop.f32.mrb[0].mxu0
    %v295 = vadd.f32 0.0, %v294
    %v296 = vpop.f32.mrb[0].mxu0
    %v297 = vpop.f32.mrb[0].mxu0
    %v298 = vpop.f32.mrb[0].mxu0
    %299 = vdwg.mxu0
    %v300 = vsel %vm253, %v295, -inf
    %301 = vmax.xlane.f32.xlu0 %v300
    %v302 = vpop.xlane.xlu0 %301
    %v303 = vsub.f32 %v295, %v302
    %v304 = vmul.f32 %v303, 1.442695
    %v305 = vpow.pop %v304
    %v306 = vsel %vm253, %v305, 0.0
    %307 = vadd.xlane.f32.xlu0 %v306
    %v308 = vpop.xlane.xlu0 %307
    %v309 = vrcp.pop %v308
    %v310 = vmul.f32 %v305, %v309
    %v311 = vpack.c.bf16 %v310, %v310
    %312 = vrot.lane.b32.xlu0 %v249, 64
    %v313 = vpop.permute.xlu0 %312
    %v315 = vsel %vm253, %v311, 0
    %vm317 = vcmask 1043456
    %v319 = vsel %vm317, %v313, 0
    %321 = vmatprep.subr.bf16.mxu0 0
    %322 = vmatpush1.bf16.msra.mxu0 %v319
    %323 = vmatprep.subr.bf16.mxu0 0
    %324 = vmatpush1.bf16.msra.mxu0 0
    %325 = vmatprep.subr.bf16.mxu0 0
    %326 = vmatpush1.bf16.msra.mxu0 0
    %327 = vmatprep.subr.bf16.mxu0 0
    %328 = vmatpush1.bf16.msra.mxu0 0
    %329 = vmatprep.subr.bf16.mxu0 0
    %330 = vmatpush1.bf16.msra.mxu0 0
    %331 = vmatprep.subr.bf16.mxu0 0
    %332 = vmatpush1.bf16.msra.mxu0 0
    %333 = vmatprep.subr.bf16.mxu0 0
    %334 = vmatpush1.bf16.msra.mxu0 0
    %335 = vmatprep.subr.bf16.mxu0 0
    %336 = vmatpush1.bf16.msra.mxu0 0
    %337 = vmatprep.subr.bf16.mxu0 0
    %338 = vmatpush1.bf16.msra.mxu0 0
    %339 = vmatprep.subr.bf16.mxu0 0
    %340 = vmatpush1.bf16.msra.mxu0 0
    %341 = vmatprep.subr.bf16.mxu0 0
    %342 = vmatpush1.bf16.msra.mxu0 0
    %343 = vmatprep.subr.bf16.mxu0 0
    %344 = vmatpush1.bf16.msra.mxu0 0
    %345 = vmatprep.subr.bf16.mxu0 0
    %346 = vmatpush1.bf16.msra.mxu0 0
    %347 = vmatprep.subr.bf16.mxu0 0
    %348 = vmatpush1.bf16.msra.mxu0 0
    %349 = vmatprep.subr.bf16.mxu0 0
    %350 = vmatpush1.bf16.msra.mxu0 0
    %351 = vmatprep.subr.bf16.mxu0 0
    %352 = vmatpush1.bf16.msra.mxu0 0
    %353 = vmatprep.mubr.bf16.mxu0 0
    %354 = vmatmul.mubr.bf16.gmra.mrb[0].mxu0 %v315
    %v355 = vpop.f32.mrb[0].mxu0
    %v356 = vadd.f32 0.0, %v355
    %v357 = vpop.f32.mrb[0].mxu0
    %v358 = vpop.f32.mrb[0].mxu0
    %v359 = vpop.f32.mrb[0].mxu0
    %360 = vdwg.mxu0
    %361 = vst.msk [vmem:[#allocation2] sm:$0xff] %vm253, %v356
    %362 = vrot.lane.b32.xlu0 %v249, 120
    %v363 = vpop.permute.xlu0 %362
    %364 = vrot.lane.b32.xlu0 %v249, 88
    %v365 = vpop.permute.xlu0 %364
    %v367 = vsel %vm253, %v363, 0
    %v370 = vsel %vm253, %v365, 0
    %372 = vmatprep.subr.bf16.mxu0 0
    %373 = vmatpush1.bf16.xpose.msra.mxu0 %v370
    %374 = vmatprep.subr.bf16.mxu0 0
    %375 = vmatpush1.bf16.xpose.msra.mxu0 0
    %376 = vmatprep.subr.bf16.mxu0 0
    %377 = vmatpush1.bf16.xpose.msra.mxu0 0
    %378 = vmatprep.subr.bf16.mxu0 0
    %379 = vmatpush1.bf16.xpose.msra.mxu0 0
    %380 = vmatprep.subr.bf16.mxu0 0
    %381 = vmatpush1.bf16.xpose.msra.mxu0 0
    %382 = vmatprep.subr.bf16.mxu0 0
    %383 = vmatpush1.bf16.xpose.msra.mxu0 0
    %384 = vmatprep.subr.bf16.mxu0 0
    %385 = vmatpush1.bf16.xpose.msra.mxu0 0
    %386 = vmatprep.subr.bf16.mxu0 0
    %387 = vmatpush1.bf16.xpose.msra.mxu0 0
    %388 = vmatprep.subr.bf16.mxu0 0
    %389 = vmatpush1.bf16.xpose.msra.mxu0 0
    %390 = vmatprep.subr.bf16.mxu0 0
    %391 = vmatpush1.bf16.xpose.msra.mxu0 0
    %392 = vmatprep.subr.bf16.mxu0 0
    %393 = vmatpush1.bf16.xpose.msra.mxu0 0
    %394 = vmatprep.subr.bf16.mxu0 0
    %395 = vmatpush1.bf16.xpose.msra.mxu0 0
    %396 = vmatprep.subr.bf16.mxu0 0
    %397 = vmatpush1.bf16.xpose.msra.mxu0 0
    %398 = vmatprep.subr.bf16.mxu0 0
    %399 = vmatpush1.bf16.xpose.msra.mxu0 0
    %400 = vmatprep.subr.bf16.mxu0 0
    %401 = vmatpush1.bf16.xpose.msra.mxu0 0
    %402 = vmatprep.subr.bf16.mxu0 0
    %403 = vmatpush1.bf16.xpose.msra.mxu0 0
    %404 = vmatprep.mubr.bf16.mxu0 0
    %405 = vmatmul.mubr.bf16.gmra.mrb[0].mxu0 %v367
    %v406 = vpop.f32.mrb[0].mxu0
    %v407 = vadd.f32 0.0, %v406
    %v408 = vpop.f32.mrb[0].mxu0
    %v409 = vpop.f32.mrb[0].mxu0
    %v410 = vpop.f32.mrb[0].mxu0
    %411 = vdwg.mxu0
    %v412 = vsel %vm253, %v407, -inf
    %413 = vmax.xlane.f32.xlu0 %v412
    %v414 = vpop.xlane.xlu0 %413
    %v415 = vsub.f32 %v407, %v414
    %v416 = vmul.f32 %v415, 1.442695
    %v417 = vpow.pop %v416
    %v418 = vsel %vm253, %v417, 0.0
    %419 = vadd.xlane.f32.xlu0 %v418
    %v420 = vpop.xlane.xlu0 %419
    %v421 = vrcp.pop %v420
    %v422 = vmul.f32 %v417, %v421
    %v423 = vpack.c.bf16 %v422, %v422
    %424 = vrot.lane.b32.xlu0 %v249, 56
    %v425 = vpop.permute.xlu0 %424
    %v427 = vsel %vm253, %v423, 0
    %v430 = vsel %vm317, %v425, 0
    %432 = vmatprep.subr.bf16.mxu0 0
    %433 = vmatpush1.bf16.msra.mxu0 %v430
    %434 = vmatprep.subr.bf16.mxu0 0
    %435 = vmatpush1.bf16.msra.mxu0 0
    %436 = vmatprep.subr.bf16.mxu0 0
    %437 = vmatpush1.bf16.msra.mxu0 0
    %438 = vmatprep.subr.bf16.mxu0 0
    %439 = vmatpush1.bf16.msra.mxu0 0
    %440 = vmatprep.subr.bf16.mxu0 0
    %441 = vmatpush1.bf16.msra.mxu0 0
    %442 = vmatprep.subr.bf16.mxu0 0
    %443 = vmatpush1.bf16.msra.mxu0 0
    %444 = vmatprep.subr.bf16.mxu0 0
    %445 = vmatpush1.bf16.msra.mxu0 0
    %446 = vmatprep.subr.bf16.mxu0 0
    %447 = vmatpush1.bf16.msra.mxu0 0
    %448 = vmatprep.subr.bf16.mxu0 0
    %449 = vmatpush1.bf16.msra.mxu0 0
    %450 = vmatprep.subr.bf16.mxu0 0
    %451 = vmatpush1.bf16.msra.mxu0 0
    %452 = vmatprep.subr.bf16.mxu0 0
    %453 = vmatpush1.bf16.msra.mxu0 0
    %454 = vmatprep.subr.bf16.mxu0 0
    %455 = vmatpush1.bf16.msra.mxu0 0
    %456 = vmatprep.subr.bf16.mxu0 0
    %457 = vmatpush1.bf16.msra.mxu0 0
    %458 = vmatprep.subr.bf16.mxu0 0
    %459 = vmatpush1.bf16.msra.mxu0 0
    %460 = vmatprep.subr.bf16.mxu0 0
    %461 = vmatpush1.bf16.msra.mxu0 0
    %462 = vmatprep.subr.bf16.mxu0 0
    %463 = vmatpush1.bf16.msra.mxu0 0
    %464 = vmatprep.mubr.bf16.mxu0 0
    %465 = vmatmul.mubr.bf16.gmra.mrb[0].mxu0 %v427
    %v466 = vpop.f32.mrb[0].mxu0
    %v467 = vadd.f32 0.0, %v466
    %v468 = vpop.f32.mrb[0].mxu0
    %v469 = vpop.f32.mrb[0].mxu0
    %v470 = vpop.f32.mrb[0].mxu0
    %471 = vdwg.mxu0
    %473 = vrot.lane.b32.xlu0 %v467, 8
    %v474 = vpop.permute.xlu0 %473
    %vm476 = vcmask 130112
    %477 = vst.msk [vmem:[#allocation2] sm:$0xff] %vm476, %v474
    %478 = vrot.lane.b32.xlu0 %v249, 112
    %v479 = vpop.permute.xlu0 %478
    %480 = vrot.lane.b32.xlu0 %v249, 80
    %v481 = vpop.permute.xlu0 %480
    %v483 = vsel %vm253, %v479, 0
    %v486 = vsel %vm253, %v481, 0
    %488 = vmatprep.subr.bf16.mxu0 0
    %489 = vmatpush1.bf16.xpose.msra.mxu0 %v486
    %490 = vmatprep.subr.bf16.mxu0 0
    %491 = vmatpush1.bf16.xpose.msra.mxu0 0
    %492 = vmatprep.subr.bf16.mxu0 0
    %493 = vmatpush1.bf16.xpose.msra.mxu0 0
    %494 = vmatprep.subr.bf16.mxu0 0
    %495 = vmatpush1.bf16.xpose.msra.mxu0 0
    %496 = vmatprep.subr.bf16.mxu0 0
    %497 = vmatpush1.bf16.xpose.msra.mxu0 0
    %498 = vmatprep.subr.bf16.mxu0 0
    %499 = vmatpush1.bf16.xpose.msra.mxu0 0
    %500 = vmatprep.subr.bf16.mxu0 0
    %501 = vmatpush1.bf16.xpose.msra.mxu0 0
    %502 = vmatprep.subr.bf16.mxu0 0
    %503 = vmatpush1.bf16.xpose.msra.mxu0 0
    %504 = vmatprep.subr.bf16.mxu0 0
    %505 = vmatpush1.bf16.xpose.msra.mxu0 0
    %506 = vmatprep.subr.bf16.mxu0 0
    %507 = vmatpush1.bf16.xpose.msra.mxu0 0
    %508 = vmatprep.subr.bf16.mxu0 0
    %509 = vmatpush1.bf16.xpose.msra.mxu0 0
    %510 = vmatprep.subr.bf16.mxu0 0
    %511 = vmatpush1.bf16.xpose.msra.mxu0 0
    %512 = vmatprep.subr.bf16.mxu0 0
    %513 = vmatpush1.bf16.xpose.msra.mxu0 0
    %514 = vmatprep.subr.bf16.mxu0 0
    %515 = vmatpush1.bf16.xpose.msra.mxu0 0
    %516 = vmatprep.subr.bf16.mxu0 0
    %517 = vmatpush1.bf16.xpose.msra.mxu0 0
    %518 = vmatprep.subr.bf16.mxu0 0
    %519 = vmatpush1.bf16.xpose.msra.mxu0 0
    %520 = vmatprep.mubr.bf16.mxu0 0
    %521 = vmatmul.mubr.bf16.gmra.mrb[0].mxu0 %v483
    %v522 = vpop.f32.mrb[0].mxu0
    %v523 = vadd.f32 0.0, %v522
    %v524 = vpop.f32.mrb[0].mxu0
    %v525 = vpop.f32.mrb[0].mxu0
    %v526 = vpop.f32.mrb[0].mxu0
    %527 = vdwg.mxu0
    %v528 = vsel %vm253, %v523, -inf
    %529 = vmax.xlane.f32.xlu0 %v528
    %v530 = vpop.xlane.xlu0 %529
    %v531 = vsub.f32 %v523, %v530
    %v532 = vmul.f32 %v531, 1.442695
    %v533 = vpow.pop %v532
    %v534 = vsel %vm253, %v533, 0.0
    %535 = vadd.xlane.f32.xlu0 %v534
    %v536 = vpop.xlane.xlu0 %535
    %v537 = vrcp.pop %v536
    %v538 = vmul.f32 %v533, %v537
    %v539 = vpack.c.bf16 %v538, %v538
    %540 = vrot.lane.b32.xlu0 %v249, 48
    %v541 = vpop.permute.xlu0 %540
    %v543 = vsel %vm253, %v539, 0
    %v546 = vsel %vm317, %v541, 0
    %548 = vmatprep.subr.bf16.mxu0 0
    %549 = vmatpush1.bf16.msra.mxu0 %v546
    %550 = vmatprep.subr.bf16.mxu0 0
    %551 = vmatpush1.bf16.msra.mxu0 0
    %552 = vmatprep.subr.bf16.mxu0 0
    %553 = vmatpush1.bf16.msra.mxu0 0
    %554 = vmatprep.subr.bf16.mxu0 0
    %555 = vmatpush1.bf16.msra.mxu0 0
    %556 = vmatprep.subr.bf16.mxu0 0
    %557 = vmatpush1.bf16.msra.mxu0 0
    %558 = vmatprep.subr.bf16.mxu0 0
    %559 = vmatpush1.bf16.msra.mxu0 0
    %560 = vmatprep.subr.bf16.mxu0 0
    %561 = vmatpush1.bf16.msra.mxu0 0
    %562 = vmatprep.subr.bf16.mxu0 0
    %563 = vmatpush1.bf16.msra.mxu0 0
    %564 = vmatprep.subr.bf16.mxu0 0
    %565 = vmatpush1.bf16.msra.mxu0 0
    %566 = vmatprep.subr.bf16.mxu0 0
    %567 = vmatpush1.bf16.msra.mxu0 0
    %568 = vmatprep.subr.bf16.mxu0 0
    %569 = vmatpush1.bf16.msra.mxu0 0
    %570 = vmatprep.subr.bf16.mxu0 0
    %571 = vmatpush1.bf16.msra.mxu0 0
    %572 = vmatprep.subr.bf16.mxu0 0
    %573 = vmatpush1.bf16.msra.mxu0 0
    %574 = vmatprep.subr.bf16.mxu0 0
    %575 = vmatpush1.bf16.msra.mxu0 0
    %576 = vmatprep.subr.bf16.mxu0 0
    %577 = vmatpush1.bf16.msra.mxu0 0
    %578 = vmatprep.subr.bf16.mxu0 0
    %579 = vmatpush1.bf16.msra.mxu0 0
    %580 = vmatprep.mubr.bf16.mxu0 0
    %581 = vmatmul.mubr.bf16.gmra.mrb[0].mxu0 %v543
    %v582 = vpop.f32.mrb[0].mxu0
    %v583 = vadd.f32 0.0, %v582
    %v584 = vpop.f32.mrb[0].mxu0
    %v585 = vpop.f32.mrb[0].mxu0
    %v586 = vpop.f32.mrb[0].mxu0
    %587 = vdwg.mxu0
    %589 = vrot.lane.b32.xlu0 %v583, 16
    %v590 = vpop.permute.xlu0 %589
    %vm592 = vcmask 195712
    %593 = vst.msk [vmem:[#allocation2] sm:$0xff] %vm592, %v590
    %594 = vrot.lane.b32.xlu0 %v249, 104
    %v595 = vpop.permute.xlu0 %594
    %596 = vrot.lane.b32.xlu0 %v249, 72
    %v597 = vpop.permute.xlu0 %596
    %v599 = vsel %vm253, %v595, 0
    %v602 = vsel %vm253, %v597, 0
    %604 = vmatprep.subr.bf16.mxu0 0
    %605 = vmatpush1.bf16.xpose.msra.mxu0 %v602
    %606 = vmatprep.subr.bf16.mxu0 0
    %607 = vmatpush1.bf16.xpose.msra.mxu0 0
    %608 = vmatprep.subr.bf16.mxu0 0
    %609 = vmatpush1.bf16.xpose.msra.mxu0 0
    %610 = vmatprep.subr.bf16.mxu0 0
    %611 = vmatpush1.bf16.xpose.msra.mxu0 0
    %612 = vmatprep.subr.bf16.mxu0 0
    %613 = vmatpush1.bf16.xpose.msra.mxu0 0
    %614 = vmatprep.subr.bf16.mxu0 0
    %615 = vmatpush1.bf16.xpose.msra.mxu0 0
    %616 = vmatprep.subr.bf16.mxu0 0
    %617 = vmatpush1.bf16.xpose.msra.mxu0 0
    %618 = vmatprep.subr.bf16.mxu0 0
    %619 = vmatpush1.bf16.xpose.msra.mxu0 0
    %620 = vmatprep.subr.bf16.mxu0 0
    %621 = vmatpush1.bf16.xpose.msra.mxu0 0
    %622 = vmatprep.subr.bf16.mxu0 0
    %623 = vmatpush1.bf16.xpose.msra.mxu0 0
    %624 = vmatprep.subr.bf16.mxu0 0
    %625 = vmatpush1.bf16.xpose.msra.mxu0 0
    %626 = vmatprep.subr.bf16.mxu0 0
    %627 = vmatpush1.bf16.xpose.msra.mxu0 0
    %628 = vmatprep.subr.bf16.mxu0 0
    %629 = vmatpush1.bf16.xpose.msra.mxu0 0
    %630 = vmatprep.subr.bf16.mxu0 0
    %631 = vmatpush1.bf16.xpose.msra.mxu0 0
    %632 = vmatprep.subr.bf16.mxu0 0
    %633 = vmatpush1.bf16.xpose.msra.mxu0 0
    %634 = vmatprep.subr.bf16.mxu0 0
    %635 = vmatpush1.bf16.xpose.msra.mxu0 0
    %636 = vmatprep.mubr.bf16.mxu0 0
    %637 = vmatmul.mubr.bf16.gmra.mrb[0].mxu0 %v599
    %v638 = vpop.f32.mrb[0].mxu0
    %v639 = vadd.f32 0.0, %v638
    %v640 = vpop.f32.mrb[0].mxu0
    %v641 = vpop.f32.mrb[0].mxu0
    %v642 = vpop.f32.mrb[0].mxu0
    %643 = vdwg.mxu0
    %v644 = vsel %vm253, %v639, -inf
    %645 = vmax.xlane.f32.xlu0 %v644
    %v646 = vpop.xlane.xlu0 %645
    %v647 = vsub.f32 %v639, %v646
    %v648 = vmul.f32 %v647, 1.442695
    %v649 = vpow.pop %v648
    %v650 = vsel %vm253, %v649, 0.0
    %651 = vadd.xlane.f32.xlu0 %v650
    %v652 = vpop.xlane.xlu0 %651
    %v653 = vrcp.pop %v652
    %v654 = vmul.f32 %v649, %v653
    %v655 = vpack.c.bf16 %v654, %v654
    %656 = vrot.lane.b32.xlu0 %v249, 40
    %v657 = vpop.permute.xlu0 %656
    %v659 = vsel %vm253, %v655, 0
    %v662 = vsel %vm317, %v657, 0
    %664 = vmatprep.subr.bf16.mxu0 0
    %665 = vmatpush1.bf16.msra.mxu0 %v662
    %666 = vmatprep.subr.bf16.mxu0 0
    %667 = vmatpush1.bf16.msra.mxu0 0
    %668 = vmatprep.subr.bf16.mxu0 0
    %669 = vmatpush1.bf16.msra.mxu0 0
    %670 = vmatprep.subr.bf16.mxu0 0
    %671 = vmatpush1.bf16.msra.mxu0 0
    %672 = vmatprep.subr.bf16.mxu0 0
    %673 = vmatpush1.bf16.msra.mxu0 0
    %674 = vmatprep.subr.bf16.mxu0 0
    %675 = vmatpush1.bf16.msra.mxu0 0
    %676 = vmatprep.subr.bf16.mxu0 0
    %677 = vmatpush1.bf16.msra.mxu0 0
    %678 = vmatprep.subr.bf16.mxu0 0
    %679 = vmatpush1.bf16.msra.mxu0 0
    %680 = vmatprep.subr.bf16.mxu0 0
    %681 = vmatpush1.bf16.msra.mxu0 0
    %682 = vmatprep.subr.bf16.mxu0 0
    %683 = vmatpush1.bf16.msra.mxu0 0
    %684 = vmatprep.subr.bf16.mxu0 0
    %685 = vmatpush1.bf16.msra.mxu0 0
    %686 = vmatprep.subr.bf16.mxu0 0
    %687 = vmatpush1.bf16.msra.mxu0 0
    %688 = vmatprep.subr.bf16.mxu0 0
    %689 = vmatpush1.bf16.msra.mxu0 0
    %690 = vmatprep.subr.bf16.mxu0 0
    %691 = vmatpush1.bf16.msra.mxu0 0
    %692 = vmatprep.subr.bf16.mxu0 0
    %693 = vmatpush1.bf16.msra.mxu0 0
    %694 = vmatprep.subr.bf16.mxu0 0
    %695 = vmatpush1.bf16.msra.mxu0 0
    %696 = vmatprep.mubr.bf16.mxu0 0
    %697 = vmatmul.mubr.bf16.gmra.mrb[0].mxu0 %v659
    %v698 = vpop.f32.mrb[0].mxu0
    %v699 = vadd.f32 0.0, %v698
    %v700 = vpop.f32.mrb[0].mxu0
    %v701 = vpop.f32.mrb[0].mxu0
    %v702 = vpop.f32.mrb[0].mxu0
    %703 = vdwg.mxu0
    %705 = vrot.lane.b32.xlu0 %v699, 24
    %v706 = vpop.permute.xlu0 %705
    %vm708 = vcmask 261312
    %709 = vst.msk [vmem:[#allocation2] sm:$0xff] %vm708, %v706
    %v710 = vld [vmem:[#allocation2] sm:$0xff]
    %v711 = vpack.c.bf16 %v710, %v710
    %v713 = vunpack.c.l.b16 %v49
    %v714 = vpack.c.b16 %v713, %v713
    %715 = vrot.lane.b32.xlu0 %v714, 32
    %v716 = vpop.permute.xlu0 %715
    %v718 = vsel %vm67, %v716, 0
    %v721 = vsel %vm67, %v711, 0
    %723 = vmatprep.subr.bf16.mxu0 0
    %724 = vmatpush1.bf16.xpose.msra.mxu0 %v721
    %725 = vmatprep.subr.bf16.mxu0 0
    %726 = vmatpush1.bf16.xpose.msra.mxu0 0
    %727 = vmatprep.subr.bf16.mxu0 0
    %728 = vmatpush1.bf16.xpose.msra.mxu0 0
    %729 = vmatprep.subr.bf16.mxu0 0
    %730 = vmatpush1.bf16.xpose.msra.mxu0 0
    %731 = vmatprep.subr.bf16.mxu0 0
    %732 = vmatpush1.bf16.xpose.msra.mxu0 0
    %733 = vmatprep.subr.bf16.mxu0 0
    %734 = vmatpush1.bf16.xpose.msra.mxu0 0
    %735 = vmatprep.subr.bf16.mxu0 0
    %736 = vmatpush1.bf16.xpose.msra.mxu0 0
    %737 = vmatprep.subr.bf16.mxu0 0
    %738 = vmatpush1.bf16.xpose.msra.mxu0 0
    %739 = vmatprep.subr.bf16.mxu0 0
    %740 = vmatpush1.bf16.xpose.msra.mxu0 0
    %741 = vmatprep.subr.bf16.mxu0 0
    %742 = vmatpush1.bf16.xpose.msra.mxu0 0
    %743 = vmatprep.subr.bf16.mxu0 0
    %744 = vmatpush1.bf16.xpose.msra.mxu0 0
    %745 = vmatprep.subr.bf16.mxu0 0
    %746 = vmatpush1.bf16.xpose.msra.mxu0 0
    %747 = vmatprep.subr.bf16.mxu0 0
    %748 = vmatpush1.bf16.xpose.msra.mxu0 0
    %749 = vmatprep.subr.bf16.mxu0 0
    %750 = vmatpush1.bf16.xpose.msra.mxu0 0
    %751 = vmatprep.subr.bf16.mxu0 0
    %752 = vmatpush1.bf16.xpose.msra.mxu0 0
    %753 = vmatprep.subr.bf16.mxu0 0
    %754 = vmatpush1.bf16.xpose.msra.mxu0 0
    %755 = vmatprep.mubr.bf16.mxu0 0
    %756 = vmatmul.mubr.bf16.gmra.mrb[0].mxu0 %v718
    %v757 = vpop.f32.mrb[0].mxu0
    %v758 = vadd.f32 0.0, %v757
    %v759 = vpop.f32.mrb[0].mxu0
    %v760 = vpop.f32.mrb[0].mxu0
    %v761 = vpop.f32.mrb[0].mxu0
    %762 = vdwg.mxu0
    %v763 = vpack.c.bf16 %v758, %v758
    %764 = vrot.lane.b32.xlu0 %v714, 64
    %v765 = vpop.permute.xlu0 %764
    %v767 = vsel %vm253, %v763, 0
    %v770 = vsel %vm317, %v765, 0
    %772 = vmatprep.subr.bf16.mxu0 0
    %773 = vmatpush1.bf16.msra.mxu0 %v770
    %774 = vmatprep.subr.bf16.mxu0 0
    %775 = vmatpush1.bf16.msra.mxu0 0
    %776 = vmatprep.subr.bf16.mxu0 0
    %777 = vmatpush1.bf16.msra.mxu0 0
    %778 = vmatprep.subr.bf16.mxu0 0
    %779 = vmatpush1.bf16.msra.mxu0 0
    %780 = vmatprep.subr.bf16.mxu0 0
    %781 = vmatpush1.bf16.msra.mxu0 0
    %782 = vmatprep.subr.bf16.mxu0 0
    %783 = vmatpush1.bf16.msra.mxu0 0
    %784 = vmatprep.subr.bf16.mxu0 0
    %785 = vmatpush1.bf16.msra.mxu0 0
    %786 = vmatprep.subr.bf16.mxu0 0
    %787 = vmatpush1.bf16.msra.mxu0 0
    %788 = vmatprep.subr.bf16.mxu0 0
    %789 = vmatpush1.bf16.msra.mxu0 0
    %790 = vmatprep.subr.bf16.mxu0 0
    %791 = vmatpush1.bf16.msra.mxu0 0
    %792 = vmatprep.subr.bf16.mxu0 0
    %793 = vmatpush1.bf16.msra.mxu0 0
    %794 = vmatprep.subr.bf16.mxu0 0
    %795 = vmatpush1.bf16.msra.mxu0 0
    %796 = vmatprep.subr.bf16.mxu0 0
    %797 = vmatpush1.bf16.msra.mxu0 0
    %798 = vmatprep.subr.bf16.mxu0 0
    %799 = vmatpush1.bf16.msra.mxu0 0
    %800 = vmatprep.subr.bf16.mxu0 0
    %801 = vmatpush1.bf16.msra.mxu0 0
    %802 = vmatprep.subr.bf16.mxu0 0
    %803 = vmatpush1.bf16.msra.mxu0 0
    %804 = vmatprep.mubr.bf16.mxu0 0
    %805 = vmatmul.mubr.bf16.gmra.mrb[0].mxu0 %v767
    %v806 = vpop.f32.mrb[0].mxu0
    %v807 = vadd.f32 0.0, %v806
    %v808 = vpop.f32.mrb[0].mxu0
    %v809 = vpop.f32.mrb[0].mxu0
    %v810 = vpop.f32.mrb[0].mxu0
    %811 = vdwg.mxu0
    %v812 = vadd.f32 %v175, %v807
    %v814 = vunpack.c.l.b16 %v50
    %v815 = vpack.c.b16 %v814, %v814
    %816 = vrot.lane.b32.xlu0 %v815, 32
    %v817 = vpop.permute.xlu0 %816
    %v819 = vsel %vm67, %v817, 0
    %821 = vmatprep.subr.bf16.mxu0 0
    %822 = vmatpush1.bf16.xpose.msra.mxu0 %v721
    %823 = vmatprep.subr.bf16.mxu0 0
    %824 = vmatpush1.bf16.xpose.msra.mxu0 0
    %825 = vmatprep.subr.bf16.mxu0 0
    %826 = vmatpush1.bf16.xpose.msra.mxu0 0
    %827 = vmatprep.subr.bf16.mxu0 0
    %828 = vmatpush1.bf16.xpose.msra.mxu0 0
    %829 = vmatprep.subr.bf16.mxu0 0
    %830 = vmatpush1.bf16.xpose.msra.mxu0 0
    %831 = vmatprep.subr.bf16.mxu0 0
    %832 = vmatpush1.bf16.xpose.msra.mxu0 0
    %833 = vmatprep.subr.bf16.mxu0 0
    %834 = vmatpush1.bf16.xpose.msra.mxu0 0
    %835 = vmatprep.subr.bf16.mxu0 0
    %836 = vmatpush1.bf16.xpose.msra.mxu0 0
    %837 = vmatprep.subr.bf16.mxu0 0
    %838 = vmatpush1.bf16.xpose.msra.mxu0 0
    %839 = vmatprep.subr.bf16.mxu0 0
    %840 = vmatpush1.bf16.xpose.msra.mxu0 0
    %841 = vmatprep.subr.bf16.mxu0 0
    %842 = vmatpush1.bf16.xpose.msra.mxu0 0
    %843 = vmatprep.subr.bf16.mxu0 0
    %844 = vmatpush1.bf16.xpose.msra.mxu0 0
    %845 = vmatprep.subr.bf16.mxu0 0
    %846 = vmatpush1.bf16.xpose.msra.mxu0 0
    %847 = vmatprep.subr.bf16.mxu0 0
    %848 = vmatpush1.bf16.xpose.msra.mxu0 0
    %849 = vmatprep.subr.bf16.mxu0 0
    %850 = vmatpush1.bf16.xpose.msra.mxu0 0
    %851 = vmatprep.subr.bf16.mxu0 0
    %852 = vmatpush1.bf16.xpose.msra.mxu0 0
    %853 = vmatprep.mubr.bf16.mxu0 0
    %854 = vmatmul.mubr.bf16.gmra.mrb[0].mxu0 %v819
    %v855 = vpop.f32.mrb[0].mxu0
    %v856 = vadd.f32 0.0, %v855
    %v857 = vpop.f32.mrb[0].mxu0
    %v858 = vpop.f32.mrb[0].mxu0
    %v859 = vpop.f32.mrb[0].mxu0
    %860 = vdwg.mxu0
    %v861 = vpack.c.bf16 %v856, %v856
    %862 = vrot.lane.b32.xlu0 %v815, 64
    %v863 = vpop.permute.xlu0 %862
    %v865 = vsel %vm253, %v861, 0
    %v868 = vsel %vm317, %v863, 0
    %870 = vmatprep.subr.bf16.mxu0 0
    %871 = vmatpush1.bf16.msra.mxu0 %v868
    %872 = vmatprep.subr.bf16.mxu0 0
    %873 = vmatpush1.bf16.msra.mxu0 0
    %874 = vmatprep.subr.bf16.mxu0 0
    %875 = vmatpush1.bf16.msra.mxu0 0
    %876 = vmatprep.subr.bf16.mxu0 0
    %877 = vmatpush1.bf16.msra.mxu0 0
    %878 = vmatprep.subr.bf16.mxu0 0
    %879 = vmatpush1.bf16.msra.mxu0 0
    %880 = vmatprep.subr.bf16.mxu0 0
    %881 = vmatpush1.bf16.msra.mxu0 0
    %882 = vmatprep.subr.bf16.mxu0 0
    %883 = vmatpush1.bf16.msra.mxu0 0
    %884 = vmatprep.subr.bf16.mxu0 0
    %885 = vmatpush1.bf16.msra.mxu0 0
    %886 = vmatprep.subr.bf16.mxu0 0
    %887 = vmatpush1.bf16.msra.mxu0 0
    %888 = vmatprep.subr.bf16.mxu0 0
    %889 = vmatpush1.bf16.msra.mxu0 0
    %890 = vmatprep.subr.bf16.mxu0 0
    %891 = vmatpush1.bf16.msra.mxu0 0
    %892 = vmatprep.subr.bf16.mxu0 0
    %893 = vmatpush1.bf16.msra.mxu0 0
    %894 = vmatprep.subr.bf16.mxu0 0
    %895 = vmatpush1.bf16.msra.mxu0 0
    %896 = vmatprep.subr.bf16.mxu0 0
    %897 = vmatpush1.bf16.msra.mxu0 0
    %898 = vmatprep.subr.bf16.mxu0 0
    %899 = vmatpush1.bf16.msra.mxu0 0
    %900 = vmatprep.subr.bf16.mxu0 0
    %901 = vmatpush1.bf16.msra.mxu0 0
    %902 = vmatprep.mubr.bf16.mxu0 0
    %903 = vmatmul.mubr.bf16.gmra.mrb[0].mxu0 %v865
    %v904 = vpop.f32.mrb[0].mxu0
    %v905 = vadd.f32 0.0, %v904
    %v906 = vpop.f32.mrb[0].mxu0
    %v907 = vpop.f32.mrb[0].mxu0
    %v908 = vpop.f32.mrb[0].mxu0
    %909 = vdwg.mxu0
    %v910 = vadd.f32 %v812, %v905
    %v912 = vunpack.c.l.b16 %v51
    %v913 = vpack.c.b16 %v912, %v912
    %914 = vrot.lane.b32.xlu0 %v913, 32
    %v915 = vpop.permute.xlu0 %914
    %v917 = vsel %vm67, %v915, 0
    %919 = vmatprep.subr.bf16.mxu0 0
    %920 = vmatpush1.bf16.xpose.msra.mxu0 %v721
    %921 = vmatprep.subr.bf16.mxu0 0
    %922 = vmatpush1.bf16.xpose.msra.mxu0 0
    %923 = vmatprep.subr.bf16.mxu0 0
    %924 = vmatpush1.bf16.xpose.msra.mxu0 0
    %925 = vmatprep.subr.bf16.mxu0 0
    %926 = vmatpush1.bf16.xpose.msra.mxu0 0
    %927 = vmatprep.subr.bf16.mxu0 0
    %928 = vmatpush1.bf16.xpose.msra.mxu0 0
    %929 = vmatprep.subr.bf16.mxu0 0
    %930 = vmatpush1.bf16.xpose.msra.mxu0 0
    %931 = vmatprep.subr.bf16.mxu0 0
    %932 = vmatpush1.bf16.xpose.msra.mxu0 0
    %933 = vmatprep.subr.bf16.mxu0 0
    %934 = vmatpush1.bf16.xpose.msra.mxu0 0
    %935 = vmatprep.subr.bf16.mxu0 0
    %936 = vmatpush1.bf16.xpose.msra.mxu0 0
    %937 = vmatprep.subr.bf16.mxu0 0
    %938 = vmatpush1.bf16.xpose.msra.mxu0 0
    %939 = vmatprep.subr.bf16.mxu0 0
    %940 = vmatpush1.bf16.xpose.msra.mxu0 0
    %941 = vmatprep.subr.bf16.mxu0 0
    %942 = vmatpush1.bf16.xpose.msra.mxu0 0
    %943 = vmatprep.subr.bf16.mxu0 0
    %944 = vmatpush1.bf16.xpose.msra.mxu0 0
    %945 = vmatprep.subr.bf16.mxu0 0
    %946 = vmatpush1.bf16.xpose.msra.mxu0 0
    %947 = vmatprep.subr.bf16.mxu0 0
    %948 = vmatpush1.bf16.xpose.msra.mxu0 0
    %949 = vmatprep.subr.bf16.mxu0 0
    %950 = vmatpush1.bf16.xpose.msra.mxu0 0
    %951 = vmatprep.mubr.bf16.mxu0 0
    %952 = vmatmul.mubr.bf16.gmra.mrb[0].mxu0 %v917
    %v953 = vpop.f32.mrb[0].mxu0
    %v954 = vadd.f32 0.0, %v953
    %v955 = vpop.f32.mrb[0].mxu0
    %v956 = vpop.f32.mrb[0].mxu0
    %v957 = vpop.f32.mrb[0].mxu0
    %958 = vdwg.mxu0
    %v959 = vpack.c.bf16 %v954, %v954
    %960 = vrot.lane.b32.xlu0 %v913, 64
    %v961 = vpop.permute.xlu0 %960
    %v963 = vsel %vm253, %v959, 0
    %v966 = vsel %vm317, %v961, 0
    %968 = vmatprep.subr.bf16.mxu0 0
    %969 = vmatpush1.bf16.msra.mxu0 %v966
    %970 = vmatprep.subr.bf16.mxu0 0
    %971 = vmatpush1.bf16.msra.mxu0 0
    %972 = vmatprep.subr.bf16.mxu0 0
    %973 = vmatpush1.bf16.msra.mxu0 0
    %974 = vmatprep.subr.bf16.mxu0 0
    %975 = vmatpush1.bf16.msra.mxu0 0
    %976 = vmatprep.subr.bf16.mxu0 0
    %977 = vmatpush1.bf16.msra.mxu0 0
    %978 = vmatprep.subr.bf16.mxu0 0
    %979 = vmatpush1.bf16.msra.mxu0 0
    %980 = vmatprep.subr.bf16.mxu0 0
    %981 = vmatpush1.bf16.msra.mxu0 0
    %982 = vmatprep.subr.bf16.mxu0 0
    %983 = vmatpush1.bf16.msra.mxu0 0
    %984 = vmatprep.subr.bf16.mxu0 0
    %985 = vmatpush1.bf16.msra.mxu0 0
    %986 = vmatprep.subr.bf16.mxu0 0
    %987 = vmatpush1.bf16.msra.mxu0 0
    %988 = vmatprep.subr.bf16.mxu0 0
    %989 = vmatpush1.bf16.msra.mxu0 0
    %990 = vmatprep.subr.bf16.mxu0 0
    %991 = vmatpush1.bf16.msra.mxu0 0
    %992 = vmatprep.subr.bf16.mxu0 0
    %993 = vmatpush1.bf16.msra.mxu0 0
    %994 = vmatprep.subr.bf16.mxu0 0
    %995 = vmatpush1.bf16.msra.mxu0 0
    %996 = vmatprep.subr.bf16.mxu0 0
    %997 = vmatpush1.bf16.msra.mxu0 0
    %998 = vmatprep.subr.bf16.mxu0 0
    %999 = vmatpush1.bf16.msra.mxu0 0
    %1000 = vmatprep.mubr.bf16.mxu0 0
    %1001 = vmatmul.mubr.bf16.gmra.mrb[0].mxu0 %v963
    %v1002 = vpop.f32.mrb[0].mxu0
    %v1003 = vadd.f32 0.0, %v1002
    %v1004 = vpop.f32.mrb[0].mxu0
    %v1005 = vpop.f32.mrb[0].mxu0
    %v1006 = vpop.f32.mrb[0].mxu0
    %1007 = vdwg.mxu0
    %v1008 = vadd.f32 %v910, %v1003
    %v1010 = vunpack.c.l.b16 %v52
    %v1011 = vpack.c.b16 %v1010, %v1010
    %1012 = vrot.lane.b32.xlu0 %v1011, 32
    %v1013 = vpop.permute.xlu0 %1012
    %v1015 = vsel %vm67, %v1013, 0
    %1017 = vmatprep.subr.bf16.mxu0 0
    %1018 = vmatpush1.bf16.xpose.msra.mxu0 %v721
    %1019 = vmatprep.subr.bf16.mxu0 0
    %1020 = vmatpush1.bf16.xpose.msra.mxu0 0
    %1021 = vmatprep.subr.bf16.mxu0 0
    %1022 = vmatpush1.bf16.xpose.msra.mxu0 0
    %1023 = vmatprep.subr.bf16.mxu0 0
    %1024 = vmatpush1.bf16.xpose.msra.mxu0 0
    %1025 = vmatprep.subr.bf16.mxu0 0
    %1026 = vmatpush1.bf16.xpose.msra.mxu0 0
    %1027 = vmatprep.subr.bf16.mxu0 0
    %1028 = vmatpush1.bf16.xpose.msra.mxu0 0
    %1029 = vmatprep.subr.bf16.mxu0 0
    %1030 = vmatpush1.bf16.xpose.msra.mxu0 0
    %1031 = vmatprep.subr.bf16.mxu0 0
    %1032 = vmatpush1.bf16.xpose.msra.mxu0 0
    %1033 = vmatprep.subr.bf16.mxu0 0
    %1034 = vmatpush1.bf16.xpose.msra.mxu0 0
    %1035 = vmatprep.subr.bf16.mxu0 0
    %1036 = vmatpush1.bf16.xpose.msra.mxu0 0
    %1037 = vmatprep.subr.bf16.mxu0 0
    %1038 = vmatpush1.bf16.xpose.msra.mxu0 0
    %1039 = vmatprep.subr.bf16.mxu0 0
    %1040 = vmatpush1.bf16.xpose.msra.mxu0 0
    %1041 = vmatprep.subr.bf16.mxu0 0
    %1042 = vmatpush1.bf16.xpose.msra.mxu0 0
    %1043 = vmatprep.subr.bf16.mxu0 0
    %1044 = vmatpush1.bf16.xpose.msra.mxu0 0
    %1045 = vmatprep.subr.bf16.mxu0 0
    %1046 = vmatpush1.bf16.xpose.msra.mxu0 0
    %1047 = vmatprep.subr.bf16.mxu0 0
    %1048 = vmatpush1.bf16.xpose.msra.mxu0 0
    %1049 = vmatprep.mubr.bf16.mxu0 0
    %1050 = vmatmul.mubr.bf16.gmra.mrb[0].mxu0 %v1015
    %v1051 = vpop.f32.mrb[0].mxu0
    %v1052 = vadd.f32 0.0, %v1051
    %v1053 = vpop.f32.mrb[0].mxu0
    %v1054 = vpop.f32.mrb[0].mxu0
    %v1055 = vpop.f32.mrb[0].mxu0
    %1056 = vdwg.mxu0
    %v1057 = vpack.c.bf16 %v1052, %v1052
    %1058 = vrot.lane.b32.xlu0 %v1011, 64
    %v1059 = vpop.permute.xlu0 %1058
    %v1061 = vsel %vm253, %v1057, 0
    %v1064 = vsel %vm317, %v1059, 0
    %1066 = vmatprep.subr.bf16.mxu0 0
    %1067 = vmatpush1.bf16.msra.mxu0 %v1064
    %1068 = vmatprep.subr.bf16.mxu0 0
    %1069 = vmatpush1.bf16.msra.mxu0 0
    %1070 = vmatprep.subr.bf16.mxu0 0
    %1071 = vmatpush1.bf16.msra.mxu0 0
    %1072 = vmatprep.subr.bf16.mxu0 0
    %1073 = vmatpush1.bf16.msra.mxu0 0
    %1074 = vmatprep.subr.bf16.mxu0 0
    %1075 = vmatpush1.bf16.msra.mxu0 0
    %1076 = vmatprep.subr.bf16.mxu0 0
    %1077 = vmatpush1.bf16.msra.mxu0 0
    %1078 = vmatprep.subr.bf16.mxu0 0
    %1079 = vmatpush1.bf16.msra.mxu0 0
    %1080 = vmatprep.subr.bf16.mxu0 0
    %1081 = vmatpush1.bf16.msra.mxu0 0
    %1082 = vmatprep.subr.bf16.mxu0 0
    %1083 = vmatpush1.bf16.msra.mxu0 0
    %1084 = vmatprep.subr.bf16.mxu0 0
    %1085 = vmatpush1.bf16.msra.mxu0 0
    %1086 = vmatprep.subr.bf16.mxu0 0
    %1087 = vmatpush1.bf16.msra.mxu0 0
    %1088 = vmatprep.subr.bf16.mxu0 0
    %1089 = vmatpush1.bf16.msra.mxu0 0
    %1090 = vmatprep.subr.bf16.mxu0 0
    %1091 = vmatpush1.bf16.msra.mxu0 0
    %1092 = vmatprep.subr.bf16.mxu0 0
    %1093 = vmatpush1.bf16.msra.mxu0 0
    %1094 = vmatprep.subr.bf16.mxu0 0
    %1095 = vmatpush1.bf16.msra.mxu0 0
    %1096 = vmatprep.subr.bf16.mxu0 0
    %1097 = vmatpush1.bf16.msra.mxu0 0
    %1098 = vmatprep.mubr.bf16.mxu0 0
    %1099 = vmatmul.mubr.bf16.gmra.mrb[0].mxu0 %v1061
    %v1100 = vpop.f32.mrb[0].mxu0
    %v1101 = vadd.f32 0.0, %v1100
    %v1102 = vpop.f32.mrb[0].mxu0
    %v1103 = vpop.f32.mrb[0].mxu0
    %v1104 = vpop.f32.mrb[0].mxu0
    %1105 = vdwg.mxu0
    %v1106 = vadd.f32 %v1008, %v1101
    %1107 = vst.msk [vmem:[#allocation8] sm:$0xff] %vm67, %v1106
    // Predicated region
    $region18: #{encoder_layer.1} parent=1 // pred_check
      _
    $region19: #{encoder_layer.1} parent=1 // pred_check_branch
      %1109 = sbr.rel (0) target = $region21
    $region20: #{encoder_layer.1} parent=1 // pred_region
      %s1111 = ssub.s32 128, 128
      %1112 = vsyncadd [#allocation5], %s1111
      %s1114 = sshll.u32 [#allocation8], 4
      %s1115 = int_to_ptr.vmem [resolvable:$true] %s1114
      %1117 = dma.vmem_to_hbm [thread:$0]  %s1115, 128, %s2, [#allocation5]
    $region21: #{encoder_layer.1} parent=1 // pred_fallthru
      _
    // Predicated region
    $region22: #{encoder_layer.1} parent=1 // pred_check
      _
    $region23: #{encoder_layer.1} parent=1 // pred_check_branch
      %1119 = sbr.rel (0) target = $region25
    $region24: #{encoder_layer.1} parent=1 // pred_region
      %1120 = dma.done [#allocation5], 128
    $region25: #{encoder_layer.1} parent=1 // pred_fallthru
      _
    %1121 = vsyncpa [#allocation4], 1
    %1122 = vsyncpa [#allocation7], 1
    %1123 = vsyncpa [#allocation5], 1

</llo_original>
